<compile_context>
chip_gen: v6e
topology: v6e:2x2x1
jax: 0.10.0
libtpu: 0.0.40
codegen_flags: <defaults>
</compile_context>

<pallas_src>
import functools

import numpy as np
import jax
import jax.numpy as jnp
from jax import lax
from jax.experimental import pallas as pl
from jax.experimental.pallas import tpu as pltpu


def _round_up(x, m):
    return ((x + m - 1) // m) * m


def _kmer2kmer_embedding_kernel(ids_ref, kpos_ref, pos_ref, kw_ref, tab_ref,
                                out_ref, gbuf, *, seq_len, tile):
    # ids_ref : SMEM (B*T,)   int32   flattened token ids (scalar prefetch)
    # kpos_ref: SMEM (B,)     float32 k-mer position scalar per batch element
    # pos_ref : VMEM (tt, D)          positional-embedding rows for this tile
    # kw_ref  : VMEM (1, D)           Linear(1, D, bias=False).weight as a row
    # tab_ref : VMEM (V, D)           word-embedding table, resident all grid
    # out_ref : VMEM (tt, D)          output tile (batch dim squeezed)
    # gbuf    : VMEM (tt, D)          gather landing buffer (table dtype)
    b = pl.program_id(0)
    t = pl.program_id(1)
    base = b * seq_len + t * tile
    d = out_ref.shape[-1]

    # In-VMEM row gather: one dynamic sublane-slice read + write per token.
    def gather_row(i, carry):
        tok = ids_ref[base + i]                       # scalar SMEM read
        gbuf[pl.ds(i, 1), :] = tab_ref[pl.ds(tok, 1), :]
        return carry

    lax.fori_loop(0, tile, gather_row, 0, unroll=min(8, tile))

    # Epilogue: word + (pos + kmer_pos * W_k) * (1/sqrt(n_embd)).
    # (No DMA latency to hide anymore, so no need to hoist above the loop.)
    scale = 1.0 / float(np.sqrt(d))
    kpos = kpos_ref[b]                                # scalar SMEM read
    add = (pos_ref[...].astype(jnp.float32)
           + kpos * kw_ref[...].astype(jnp.float32)) * scale
    out = gbuf[...].astype(jnp.float32) + add
    out_ref[...] = out.astype(out_ref.dtype)


def transformer_kmer2kmer_embedding(x, kmer_pos, word_table, pos_table,
                                    kmer_weight, *, tt=None):
    """Glue wrapper: tiny parameter reshapes in plain JAX, hot path in Pallas."""
    B, T = x.shape
    V, D = word_table.shape
    assert pos_table.shape[0] >= T and pos_table.shape[1] == D
    assert kmer_weight.shape == (D, 1)

    if tt is None:
        tt = min(T, 256)                              # sequence tile size
    assert T % tt == 0, "sequence length must be divisible by the tile size"
    assert tt == T or tt % 8 == 0, "tile must be a multiple of 8 or cover T"
    n_t = T // tt

    # nn.Embedding would raise on out-of-range ids; clamp so the in-VMEM
    # lookup stays in bounds on-TPU.
    ids_flat = jnp.clip(x.reshape(-1).astype(jnp.int32), 0, V - 1)
    kpos_flat = kmer_pos.reshape(B).astype(jnp.float32)
    pos_rows = pos_table[:T].astype(jnp.float32)
    # nn.Linear(1, D, bias=False).weight has shape (D, 1) -> row vector (1, D).
    kw = kmer_weight.reshape(1, D).astype(jnp.float32)
    word_tab = word_table                             # keep storage dtype

    # VMEM budget: resident table (possibly still double-buffered by the
    # pipeline) + double-buffered pos/out tiles + gather scratch + margin.
    lane = _round_up(D, 128)
    tab_item = np.dtype(word_table.dtype).itemsize
    table_vmem = _round_up(V, 8) * lane * tab_item
    tile_vmem = _round_up(tt, 8) * lane * 4
    vmem_needed = 2 * (table_vmem + 3 * tile_vmem) + tile_vmem + (2 << 20)
    assert vmem_needed < (48 << 20), (
        "word table too large for a VMEM-resident lookup; use an HBM-gather "
        "variant")  # TODO(synk): double-buffered HBM row-gather fallback
    vmem_limit = int(min(max(vmem_needed, 8 << 20), 64 << 20))

    kernel = functools.partial(_kmer2kmer_embedding_kernel,
                               seq_len=T, tile=tt)

    grid_spec = pltpu.PrefetchScalarGridSpec(
        num_scalar_prefetch=1,                        # flat token ids -> SMEM
        grid=(B, n_t),
        in_specs=[
            pl.BlockSpec(memory_space=pltpu.MemorySpace.SMEM),   # kmer_pos (B,)
            pl.BlockSpec((tt, D), lambda b, t, ids: (t, 0)),     # pos rows
            pl.BlockSpec((1, D), lambda b, t, ids: (0, 0)),      # kmer weight
            pl.BlockSpec((V, D), lambda b, t, ids: (0, 0)),      # word table (VMEM)
        ],
        out_specs=pl.BlockSpec((None, tt, D), lambda b, t, ids: (b, t, 0)),
        scratch_shapes=[
            pltpu.VMEM((tt, D), word_table.dtype),   # gather landing buffer
        ],
    )

    return pl.pallas_call(
        kernel,
        out_shape=jax.ShapeDtypeStruct((B, T, D), jnp.float32),
        grid_spec=grid_spec,
        compiler_params=pltpu.CompilerParams(
            dimension_semantics=("parallel", "parallel"),
            vmem_limit_bytes=vmem_limit),
    )(ids_flat, kpos_flat, pos_rows, kw, word_tab)


if __name__ == "__main__":
    # Small shapes consistent with the module's forward.
    B, T, D, V, MAX_POS = 2, 16, 32, 64, 32

    key = jax.random.PRNGKey(0)
    k_word, k_pos, k_kw, k_ids, k_kpos = jax.random.split(key, 5)

    # Synthetic deterministic parameters (shapes from the module __init__).
    word_table = jax.random.normal(k_word, (V, D), dtype=jnp.float32) * 0.02
    pos_table = jax.random.normal(k_pos, (MAX_POS, D), dtype=jnp.float32) * 0.02
    kmer_weight = jax.random.normal(k_kw, (D, 1), dtype=jnp.float32) * 0.02

    # Inputs.
    x = jax.random.randint(k_ids, (B, T), 0, V, dtype=jnp.int32)
    kmer_pos = jax.random.uniform(k_kpos, (B, 1), dtype=jnp.float32) * 10.0

    out = transformer_kmer2kmer_embedding(x, kmer_pos, word_table, pos_table,
                                          kmer_weight, tt=8)   # grid = (2, 2)
    out = jax.block_until_ready(out)

    # Pure-JAX reference (dropout is identity in eval mode).
    scale = 1.0 / np.sqrt(D)
    ref = (word_table[x]
           + pos_table[:T][None, :, :] * scale
           + (kmer_pos @ kmer_weight.T)[:, None, :] * scale)
    np.testing.assert_allclose(np.asarray(out), np.asarray(ref),
                               rtol=1e-5, atol=1e-5)

    print("KERNEL_OK")
</pallas_src>

<mosaic_0001>
module attributes {stable_mosaic.version = 11 : i64} {
  func.func @_kmer2kmer_embedding_kernel(%arg0: i32, %arg1: i32, %arg2: memref<32xi32, #tpu.memory_space<smem>>, %arg3: memref<2xf32, #tpu.memory_space<smem>>, %arg4: memref<8x32xf32, #tpu.memory_space<vmem>>, %arg5: memref<1x32xf32, #tpu.memory_space<vmem>>, %arg6: memref<64x32xf32, #tpu.memory_space<vmem>>, %arg7: memref<1x8x32xf32, #tpu.memory_space<vmem>>, %arg8: memref<8x32xf32, #tpu.memory_space<vmem>>) attributes {dimension_semantics = [#tpu.dimension_semantics<parallel>, #tpu.dimension_semantics<parallel>], iteration_bounds = array<i64: 2, 2>, scalar_prefetch = 1 : i64, scratch_operands = 1 : i64, tpu.core_type = #tpu.core_type<tc>, window_params = [{transform_indices = @transform_0, window_bounds = array<i64: 2>}, {transform_indices = @transform_1, window_bounds = array<i64: 8, 32>}, {pipeline_mode = #tpu.pipeline_mode<synchronous>, transform_indices = @transform_2, window_bounds = array<i64: 1, 32>}, {pipeline_mode = #tpu.pipeline_mode<synchronous>, transform_indices = @transform_3, window_bounds = array<i64: 64, 32>}, {transform_indices = @transform_4, window_bounds = array<i64: 1, 8, 32>}]} {
    %c16_i32 = arith.constant 16 : i32
    %0 = arith.muli %arg0, %c16_i32 : i32
    %c8_i32 = arith.constant 8 : i32
    %1 = arith.muli %arg1, %c8_i32 : i32
    %2 = arith.addi %0, %1 : i32
    %c0_i32 = arith.constant 0 : i32
    %3 = arith.addi %2, %c0_i32 : i32
    %4 = arith.index_cast %3 : i32 to index
    %5 = memref.load %arg2[%4] : memref<32xi32, #tpu.memory_space<smem>>
    %6 = arith.index_cast %5 : i32 to index
    %c0 = arith.constant 0 : index
    %7 = vector.load %arg6[%6, %c0] : memref<64x32xf32, #tpu.memory_space<vmem>>, vector<1x32xf32>
    %8 = arith.index_cast %c0_i32 : i32 to index
    %c0_0 = arith.constant 0 : index
    %9 = vector.load %arg8[%8, %c0_0] : memref<8x32xf32, #tpu.memory_space<vmem>>, vector<1x32xf32>
    tpu.vector_store %arg8[%8, %c0_0], %7 {strides = array<i32>} : memref<8x32xf32, #tpu.memory_space<vmem>>, vector<1x32xf32>,
    %c1_i32 = arith.constant 1 : i32
    %10 = arith.addi %2, %c1_i32 : i32
    %11 = arith.index_cast %10 : i32 to index
    %12 = memref.load %arg2[%11] : memref<32xi32, #tpu.memory_space<smem>>
    %13 = arith.index_cast %12 : i32 to index
    %c0_1 = arith.constant 0 : index
    %14 = vector.load %arg6[%13, %c0_1] : memref<64x32xf32, #tpu.memory_space<vmem>>, vector<1x32xf32>
    %15 = arith.index_cast %c1_i32 : i32 to index
    %c0_2 = arith.constant 0 : index
    %16 = vector.load %arg8[%15, %c0_2] : memref<8x32xf32, #tpu.memory_space<vmem>>, vector<1x32xf32>
    tpu.vector_store %arg8[%15, %c0_2], %14 {strides = array<i32>} : memref<8x32xf32, #tpu.memory_space<vmem>>, vector<1x32xf32>,
    %c2_i32 = arith.constant 2 : i32
    %17 = arith.addi %2, %c2_i32 : i32
    %18 = arith.index_cast %17 : i32 to index
    %19 = memref.load %arg2[%18] : memref<32xi32, #tpu.memory_space<smem>>
    %20 = arith.index_cast %19 : i32 to index
    %c0_3 = arith.constant 0 : index
    %21 = vector.load %arg6[%20, %c0_3] : memref<64x32xf32, #tpu.memory_space<vmem>>, vector<1x32xf32>
    %22 = arith.index_cast %c2_i32 : i32 to index
    %c0_4 = arith.constant 0 : index
    %23 = vector.load %arg8[%22, %c0_4] : memref<8x32xf32, #tpu.memory_space<vmem>>, vector<1x32xf32>
    tpu.vector_store %arg8[%22, %c0_4], %21 {strides = array<i32>} : memref<8x32xf32, #tpu.memory_space<vmem>>, vector<1x32xf32>,
    %c3_i32 = arith.constant 3 : i32
    %24 = arith.addi %2, %c3_i32 : i32
    %25 = arith.index_cast %24 : i32 to index
    %26 = memref.load %arg2[%25] : memref<32xi32, #tpu.memory_space<smem>>
    %27 = arith.index_cast %26 : i32 to index
    %c0_5 = arith.constant 0 : index
    %28 = vector.load %arg6[%27, %c0_5] : memref<64x32xf32, #tpu.memory_space<vmem>>, vector<1x32xf32>
    %29 = arith.index_cast %c3_i32 : i32 to index
    %c0_6 = arith.constant 0 : index
    %30 = vector.load %arg8[%29, %c0_6] : memref<8x32xf32, #tpu.memory_space<vmem>>, vector<1x32xf32>
    tpu.vector_store %arg8[%29, %c0_6], %28 {strides = array<i32>} : memref<8x32xf32, #tpu.memory_space<vmem>>, vector<1x32xf32>,
    %c4_i32 = arith.constant 4 : i32
    %31 = arith.addi %2, %c4_i32 : i32
    %32 = arith.index_cast %31 : i32 to index
    %33 = memref.load %arg2[%32] : memref<32xi32, #tpu.memory_space<smem>>
    %34 = arith.index_cast %33 : i32 to index
    %c0_7 = arith.constant 0 : index
    %35 = vector.load %arg6[%34, %c0_7] : memref<64x32xf32, #tpu.memory_space<vmem>>, vector<1x32xf32>
    %36 = arith.index_cast %c4_i32 : i32 to index
    %c0_8 = arith.constant 0 : index
    %37 = vector.load %arg8[%36, %c0_8] : memref<8x32xf32, #tpu.memory_space<vmem>>, vector<1x32xf32>
    tpu.vector_store %arg8[%36, %c0_8], %35 {strides = array<i32>} : memref<8x32xf32, #tpu.memory_space<vmem>>, vector<1x32xf32>,
    %c5_i32 = arith.constant 5 : i32
    %38 = arith.addi %2, %c5_i32 : i32
    %39 = arith.index_cast %38 : i32 to index
    %40 = memref.load %arg2[%39] : memref<32xi32, #tpu.memory_space<smem>>
    %41 = arith.index_cast %40 : i32 to index
    %c0_9 = arith.constant 0 : index
    %42 = vector.load %arg6[%41, %c0_9] : memref<64x32xf32, #tpu.memory_space<vmem>>, vector<1x32xf32>
    %43 = arith.index_cast %c5_i32 : i32 to index
    %c0_10 = arith.constant 0 : index
    %44 = vector.load %arg8[%43, %c0_10] : memref<8x32xf32, #tpu.memory_space<vmem>>, vector<1x32xf32>
    tpu.vector_store %arg8[%43, %c0_10], %42 {strides = array<i32>} : memref<8x32xf32, #tpu.memory_space<vmem>>, vector<1x32xf32>,
    %c6_i32 = arith.constant 6 : i32
    %45 = arith.addi %2, %c6_i32 : i32
    %46 = arith.index_cast %45 : i32 to index
    %47 = memref.load %arg2[%46] : memref<32xi32, #tpu.memory_space<smem>>
    %48 = arith.index_cast %47 : i32 to index
    %c0_11 = arith.constant 0 : index
    %49 = vector.load %arg6[%48, %c0_11] : memref<64x32xf32, #tpu.memory_space<vmem>>, vector<1x32xf32>
    %50 = arith.index_cast %c6_i32 : i32 to index
    %c0_12 = arith.constant 0 : index
    %51 = vector.load %arg8[%50, %c0_12] : memref<8x32xf32, #tpu.memory_space<vmem>>, vector<1x32xf32>
    tpu.vector_store %arg8[%50, %c0_12], %49 {strides = array<i32>} : memref<8x32xf32, #tpu.memory_space<vmem>>, vector<1x32xf32>,
    %c7_i32 = arith.constant 7 : i32
    %52 = arith.addi %2, %c7_i32 : i32
    %53 = arith.index_cast %52 : i32 to index
    %54 = memref.load %arg2[%53] : memref<32xi32, #tpu.memory_space<smem>>
    %55 = arith.index_cast %54 : i32 to index
    %c0_13 = arith.constant 0 : index
    %56 = vector.load %arg6[%55, %c0_13] : memref<64x32xf32, #tpu.memory_space<vmem>>, vector<1x32xf32>
    %57 = arith.index_cast %c7_i32 : i32 to index
    %c0_14 = arith.constant 0 : index
    %58 = vector.load %arg8[%57, %c0_14] : memref<8x32xf32, #tpu.memory_space<vmem>>, vector<1x32xf32>
    tpu.vector_store %arg8[%57, %c0_14], %56 {strides = array<i32>} : memref<8x32xf32, #tpu.memory_space<vmem>>, vector<1x32xf32>,
    %c8_i32_15 = arith.constant 8 : i32
    %59 = arith.index_cast %arg0 : i32 to index
    %60 = memref.load %arg3[%59] : memref<2xf32, #tpu.memory_space<smem>>
    %c0_16 = arith.constant 0 : index
    %c0_17 = arith.constant 0 : index
    %61 = vector.load %arg4[%c0_16, %c0_17] : memref<8x32xf32, #tpu.memory_space<vmem>>, vector<8x32xf32>
    %c0_18 = arith.constant 0 : index
    %c0_19 = arith.constant 0 : index
    %62 = vector.load %arg5[%c0_18, %c0_19] : memref<1x32xf32, #tpu.memory_space<vmem>>, vector<1x32xf32>
    %63 = vector.broadcast %60 : f32 to vector<1x32xf32>
    %64 = arith.mulf %63, %62 : vector<1x32xf32>
    %65 = vector.broadcast %64 : vector<1x32xf32> to vector<8x32xf32>
    %66 = arith.addf %61, %65 : vector<8x32xf32>
    %cst = arith.constant 0.176776692 : f32
    %67 = vector.broadcast %cst : f32 to vector<8x32xf32>
    %68 = arith.mulf %66, %67 : vector<8x32xf32>
    %c0_20 = arith.constant 0 : index
    %c0_21 = arith.constant 0 : index
    %69 = vector.load %arg8[%c0_20, %c0_21] : memref<8x32xf32, #tpu.memory_space<vmem>>, vector<8x32xf32>
    %70 = arith.addf %69, %68 : vector<8x32xf32>
    %c0_22 = arith.constant 0 : index
    %c0_23 = arith.constant 0 : index
    %c0_24 = arith.constant 0 : index
    %71 = vector.load %arg7[%c0_22, %c0_23, %c0_24] : memref<1x8x32xf32, #tpu.memory_space<vmem>>, vector<1x8x32xf32>
    %72 = vector.shape_cast %71 : vector<1x8x32xf32> to vector<8x32xf32>
    %73 = vector.shape_cast %70 : vector<8x32xf32> to vector<1x8x32xf32>
    tpu.vector_store %arg7[%c0_22, %c0_23, %c0_24], %73 {strides = array<i32>} : memref<1x8x32xf32, #tpu.memory_space<vmem>>, vector<1x8x32xf32>,
    return
  }
  func.func @transform_0(%arg0: i32, %arg1: i32, %arg2: memref<32xi32, #tpu.memory_space<smem>>) -> i32 {
    %c0_i32 = arith.constant 0 : i32
    %c0_i32_0 = arith.constant 0 : i32
    return %c0_i32 : i32
  }
  func.func @transform_1(%arg0: i32, %arg1: i32, %arg2: memref<32xi32, #tpu.memory_space<smem>>) -> (i32, i32) {
    %c0_i32 = arith.constant 0 : i32
    %c0_i32_0 = arith.constant 0 : i32
    return %arg1, %c0_i32 : i32, i32
  }
  func.func @transform_2(%arg0: i32, %arg1: i32, %arg2: memref<32xi32, #tpu.memory_space<smem>>) -> (i32, i32) {
    %c0_i32 = arith.constant 0 : i32
    %c0_i32_0 = arith.constant 0 : i32
    %c0_i32_1 = arith.constant 0 : i32
    return %c0_i32, %c0_i32_0 : i32, i32
  }
  func.func @transform_3(%arg0: i32, %arg1: i32, %arg2: memref<32xi32, #tpu.memory_space<smem>>) -> (i32, i32) {
    %c0_i32 = arith.constant 0 : i32
    %c0_i32_0 = arith.constant 0 : i32
    %c0_i32_1 = arith.constant 0 : i32
    return %c0_i32, %c0_i32_0 : i32, i32
  }
  func.func @transform_4(%arg0: i32, %arg1: i32, %arg2: memref<32xi32, #tpu.memory_space<smem>>) -> (i32, i32, i32) {
    %c0_i32 = arith.constant 0 : i32
    %c0_i32_0 = arith.constant 0 : i32
    return %arg0, %arg1, %c0_i32 : i32, i32, i32
  }
}

</mosaic_0001>

<llo_original>
// kernel: tpu_custom_call.1
$region0: #{tpu_custom_call.1}
  #allocation0 [shape = 'u32[]', space=smem, size = 0x4, offset = 0x4, fixed_abs, tag = 'smem constant byte address 0x4 - core index']
  #allocation1 [shape = 'u32[144,128]{1,0:T(1,128)}', space=vmem, size = 0x12000, scoped, tag = 'internal scratch']
  #allocation2 [shape = 'f32[8,32]{1,0:T(8,128)}', space=vmem, size = 0x1000, scoped, tag = 'scratch operand']
  #allocation3 [shape = 's32[1]{0}', space=sflag, size = 0x4, scoped, tag = 'scoped memory for tpu_custom_call.1']
  #allocation4 [shape = 'u8[512]{0}', space=smem, size = 0x200, scoped, tag = 'prefetched SMEM operand 0']
  %s0 = inlined_call_operand.vmem [shape: s32[32], index: 0, kind: input, shape index: {}]
  %s1 = inlined_call_operand.vmem [shape: f32[2], index: 1, kind: input, shape index: {}]
  %s2 = inlined_call_operand.vmem [shape: f32[16,32], index: 2, kind: input, shape index: {}]
  %s3 = inlined_call_operand.vmem [shape: f32[1,32], index: 3, kind: input, shape index: {}]
  %s4 = inlined_call_operand.vmem [shape: f32[64,32], index: 4, kind: input, shape index: {}]
  %s5 = inlined_call_operand.hbm [shape: f32[2,16,32], index: 5, kind: output, shape index: {}]
  %s6 = sld [smem:[#allocation0]]
  $region53: #{tpu_custom_call.1} parent=0
    _
  %s8 = ssub.s32 1, %s6
  %s9 = scalar_select 0, %s8, %s6
  %s10 = sshll.u32 %s0, 4
  %s11 = int_to_ptr.vmem [resolvable:$true] %s10
  %13 = dma.vmem_to_smem %s11, 16, [#allocation4], [#allocation3]
  %14 = dma.done [#allocation3], 16
  %15 = sfence
  $region1: #{tpu_custom_call.1} parent=0
    #allocation5 [shape = 'u8[512]{0}', space=smem, size = 0x200, scoped, tag = 'input window, operand 1, single buffered']
    #allocation6 [shape = 's32[2]{0}', space=sflag, size = 0x8, scoped, tag = 'scoped memory for tpu_custom_call.1']
    #allocation7 [shape = 's32[2]{0}', space=sflag, size = 0x8, scoped, tag = 'scoped memory for tpu_custom_call.1']
    #allocation8 [shape = 'u8[8192]{0}', space=vmem, size = 0x2000, scoped, tag = 'output window, operand 0']
    %16 = vsyncpa [#allocation7], 0
    %17 = vsyncpa [#allocation6], 0
    %s18 = scalar_lea.sflag [#allocation6], 1
    %19 = vsyncpa %s18, 0
    loop: start=0, step=1, limit=6
    $region2: #{tpu_custom_call.1} parent=1 // loop_pre_header
      _
    $region3: #{tpu_custom_call.1} parent=1 // loop_header
      %s21 = sphi 0, %s25
      %p22 = scmp.ge.s32.totalorder %s21, 6
      %s28 = sphi 0, %s40
      %s29 = sphi 0, %s36
      %s30 = sphi 0, %s28
      %s31 = sphi 0, %s29
      %s32 = sphi 0, %s30
      %s33 = sphi 0, %s31
      %s41 = sphi 0, %s41
      %s43 = sphi 0, %s41
      %s44 = sphi 0, %s43
      %s58 = sphi 0, %s44
      %s64 = sphi 0, %s66
      %s67 = sphi 0, %s64
      %s68 = sphi 0, %s67
      %s84 = sphi 0, %s68
      %s88 = sphi 0, %s88
      %s90 = sphi 0, %s88
      %s91 = sphi 0, %s90
      %s105 = sphi 0, %s91
      %s109 = sphi 0, %s109
      %s111 = sphi 0, %s109
      %s112 = sphi 0, %s111
      %s126 = sphi 0, %s112
      %s134 = sphi 0, %s136
      %s137 = sphi 0, %s134
      %s138 = sphi 0, %s137
      %s154 = sphi 0, %s138
    $region4: #{tpu_custom_call.1} parent=1 // loop_header_branch
      %24 = sbr.rel (%p22) target = $region8
    $region5: #{tpu_custom_call.1} parent=1 // loop_body
      %s26 = ssub.s32 %s21, 1
      %s27 = ssub.s32 %s21, 2
      %s34 = sadd.s32 1, %s29
      %p35 = scmp.ge.s32.totalorder %s34, 2
      %s36 = scalar_select %p35, 0, %s34
      %s37 = sadd.s32 1, %s28
      %s38 = scalar_select %p35, %s37, %s28
      %p39 = scmp.ge.s32.totalorder %s38, 2
      %s40 = scalar_select %p39, 0, %s38
      %s42 = sadd.s32 %s41, 1
      %p45 = scmp.eq.s32.totalorder %s21, 3
      %p46 = scmp.ne.s32.totalorder %s41, %s43
      %p47 = scmp.eq.s32.totalorder %s21, 0
      %p48 = por %p46, %p47
      %p49 = scmp.ne.s32.totalorder %s41, %s43
      %p50 = scmp.eq.s32.totalorder %s26, 3
      %p51 = por %p49, %p50
      %p52 = scmp.ne.s32.totalorder %s43, %s44
      %p53 = scmp.eq.s32.totalorder %s26, 0
      %p54 = por %p52, %p53
      %p55 = scmp.ne.s32.totalorder %s43, %s44
      %p56 = scmp.eq.s32.totalorder %s27, 3
      %p57 = por %p55, %p56
      %p59 = scmp.ne.s32.totalorder %s44, %s58
      %p60 = scmp.eq.s32.totalorder %s27, 0
      %p61 = por %p59, %p60
      %s62 = ssub.s32 %s29, %s36
      %p63 = scmp.eq.s32.totalorder %s62, 0
      %s65 = sadd.s32 %s64, 1
      %s66 = scalar_select %p63, %s64, %s65
      %p69 = pneg %p63
      %p70 = scmp.eq.s32.totalorder %s21, 3
      %p71 = por %p69, %p70
      %p72 = scmp.ne.s32.totalorder %s64, %s67
      %p73 = scmp.eq.s32.totalorder %s21, 0
      %p74 = por %p72, %p73
      %p75 = scmp.ne.s32.totalorder %s64, %s67
      %p76 = scmp.eq.s32.totalorder %s26, 3
      %p77 = por %p75, %p76
      %p78 = scmp.ne.s32.totalorder %s67, %s68
      %p79 = scmp.eq.s32.totalorder %s26, 0
      %p80 = por %p78, %p79
      %p81 = scmp.ne.s32.totalorder %s67, %s68
      %p82 = scmp.eq.s32.totalorder %s27, 3
      %p83 = por %p81, %p82
      %p85 = scmp.ne.s32.totalorder %s68, %s84
      %p86 = scmp.eq.s32.totalorder %s27, 0
      %p87 = por %p85, %p86
      %s89 = sadd.s32 %s88, 1
      %p92 = scmp.eq.s32.totalorder %s21, 3
      %p93 = scmp.ne.s32.totalorder %s88, %s90
      %p94 = scmp.eq.s32.totalorder %s21, 0
      %p95 = por %p93, %p94
      %p96 = scmp.ne.s32.totalorder %s88, %s90
      %p97 = scmp.eq.s32.totalorder %s26, 3
      %p98 = por %p96, %p97
      %p99 = scmp.ne.s32.totalorder %s90, %s91
      %p100 = scmp.eq.s32.totalorder %s26, 0
      %p101 = por %p99, %p100
      %p102 = scmp.ne.s32.totalorder %s90, %s91
      %p103 = scmp.eq.s32.totalorder %s27, 3
      %p104 = por %p102, %p103
      %p106 = scmp.ne.s32.totalorder %s91, %s105
      %p107 = scmp.eq.s32.totalorder %s27, 0
      %p108 = por %p106, %p107
      %s110 = sadd.s32 %s109, 1
      %p113 = scmp.eq.s32.totalorder %s21, 3
      %p114 = scmp.ne.s32.totalorder %s109, %s111
      %p115 = scmp.eq.s32.totalorder %s21, 0
      %p116 = por %p114, %p115
      %p117 = scmp.ne.s32.totalorder %s109, %s111
      %p118 = scmp.eq.s32.totalorder %s26, 3
      %p119 = por %p117, %p118
      %p120 = scmp.ne.s32.totalorder %s111, %s112
      %p121 = scmp.eq.s32.totalorder %s26, 0
      %p122 = por %p120, %p121
      %p123 = scmp.ne.s32.totalorder %s111, %s112
      %p124 = scmp.eq.s32.totalorder %s27, 3
      %p125 = por %p123, %p124
      %p127 = scmp.ne.s32.totalorder %s112, %s126
      %p128 = scmp.eq.s32.totalorder %s27, 0
      %p129 = por %p127, %p128
      %s130 = ssub.s32 %s28, %s40
      %s131 = ssub.s32 %s29, %s36
      %s132 = sor.u32 %s130, %s131
      %p133 = scmp.eq.s32.totalorder %s132, 0
      %s135 = sadd.s32 %s134, 1
      %s136 = scalar_select %p133, %s134, %s135
      %p139 = pneg %p133
      %p140 = scmp.eq.s32.totalorder %s21, 3
      %p141 = por %p139, %p140
      %p142 = scmp.ne.s32.totalorder %s134, %s137
      %p143 = scmp.eq.s32.totalorder %s21, 0
      %p144 = por %p142, %p143
      %p145 = scmp.ne.s32.totalorder %s134, %s137
      %p146 = scmp.eq.s32.totalorder %s26, 3
      %p147 = por %p145, %p146
      %p148 = scmp.ne.s32.totalorder %s137, %s138
      %p149 = scmp.eq.s32.totalorder %s26, 0
      %p150 = por %p148, %p149
      %p151 = scmp.ne.s32.totalorder %s137, %s138
      %p152 = scmp.eq.s32.totalorder %s27, 3
      %p153 = por %p151, %p152
      %p155 = scmp.ne.s32.totalorder %s138, %s154
      %p156 = scmp.eq.s32.totalorder %s27, 0
      %p157 = por %p155, %p156
      %p158 = scmp.le.s32.totalorder 1, %s21
      %p159 = scmp.lt.s32.totalorder %s21, 5
      %p160 = pnand %p158, %p159
      %p161 = pneg %p160
      // Predicated region
      $region9: #{tpu_custom_call.1} parent=5 // pred_check
        _
      $region10: #{tpu_custom_call.1} parent=5 // pred_check_branch
        %163 = sbr.rel (%p160) target = $region12
      $region11: #{tpu_custom_call.1} parent=5 // pred_region
        %s164 = ssub.s32 %s21, 1
        // Predicated region
        $region13: #{tpu_custom_call.1} parent=11 // pred_check
          %p165 = pneg %p54
        $region14: #{tpu_custom_call.1} parent=11 // pred_check_branch
          %167 = sbr.rel (%p165) target = $region16
        $region15: #{tpu_custom_call.1} parent=11 // pred_region
          %s169 = ssub.s32 16, 16
          %170 = vsyncadd [#allocation7], %s169
          %s172 = sshll.u32 %s1, 4
          %s173 = int_to_ptr.vmem [resolvable:$true] %s172
          %175 = dma.vmem_to_smem %s173, 16, [#allocation5], [#allocation7]
        $region16: #{tpu_custom_call.1} parent=11 // pred_fallthru
          _
        // Predicated region
        $region17: #{tpu_custom_call.1} parent=11 // pred_check
          %p176 = pneg %p101
        $region18: #{tpu_custom_call.1} parent=11 // pred_check_branch
          %178 = sbr.rel (%p176) target = $region20
        $region19: #{tpu_custom_call.1} parent=11 // pred_region
          _
        $region20: #{tpu_custom_call.1} parent=11 // pred_fallthru
          _
        // Predicated region
        $region21: #{tpu_custom_call.1} parent=11 // pred_check
          %p179 = pneg %p122
        $region22: #{tpu_custom_call.1} parent=11 // pred_check_branch
          %181 = sbr.rel (%p179) target = $region24
        $region23: #{tpu_custom_call.1} parent=11 // pred_region
          _
        $region24: #{tpu_custom_call.1} parent=11 // pred_fallthru
          _
      $region12: #{tpu_custom_call.1} parent=5 // pred_fallthru
        _
      %p182 = scmp.lt.s32.totalorder %s21, 4
      // Predicated region
      $region25: #{tpu_custom_call.1} parent=5 // pred_check
        %p183 = pneg %p182
      $region26: #{tpu_custom_call.1} parent=5 // pred_check_branch
        %185 = sbr.rel (%p183) target = $region28
      $region27: #{tpu_custom_call.1} parent=5 // pred_region
        // Predicated region
        $region29: #{tpu_custom_call.1} parent=27 // pred_check
          %p186 = pneg %p74
        $region30: #{tpu_custom_call.1} parent=27 // pred_check_branch
          %188 = sbr.rel (%p186) target = $region32
        $region31: #{tpu_custom_call.1} parent=27 // pred_region
          %p189 = scmp.lt.s32.totalorder %s29, 1
          %s190 = scalar_select %p189, %s29, 1
          %s191 = smul.addr %s190, 8
          %s192 = scalar_lea.vmem %s2, %s191
        $region32: #{tpu_custom_call.1} parent=27 // pred_fallthru
          _
      $region28: #{tpu_custom_call.1} parent=5 // pred_fallthru
        _
      %p193 = scmp.le.s32.totalorder 1, %s21
      %p194 = scmp.lt.s32.totalorder %s21, 5
      %p195 = pnand %p193, %p194
      %p196 = pneg %p195
      // Predicated region
      $region33: #{tpu_custom_call.1} parent=5 // pred_check
        _
      $region34: #{tpu_custom_call.1} parent=5 // pred_check_branch
        %198 = sbr.rel (%p195) target = $region36
      $region35: #{tpu_custom_call.1} parent=5 // pred_region
        %s199 = ssub.s32 %s21, 1
        // Predicated region
        $region37: #{tpu_custom_call.1} parent=35 // pred_check
          %p200 = pneg %p54
        $region38: #{tpu_custom_call.1} parent=35 // pred_check_branch
          %202 = sbr.rel (%p200) target = $region40
        $region39: #{tpu_custom_call.1} parent=35 // pred_region
          %203 = dma.done [#allocation7], 16
        $region40: #{tpu_custom_call.1} parent=35 // pred_fallthru
          _
        %204 = sfence
        %p205 = pneg %p54
        %p206 = pneg %p51
        %p207 = scmp.lt.s32.totalorder %s31, 1
        %s208 = scalar_select %p207, %s31, 1
        %s209 = smul.addr %s208, 8
        %s210 = scalar_lea.vmem %s2, %s209
        %p211 = pneg %p80
        %p212 = pneg %p77
        %p213 = pneg %p101
        %p214 = pneg %p98
        %p215 = pneg %p122
        %p216 = pneg %p119
        %p217 = pneg %p150
        %p218 = pneg %p147
        %s219 = sand.u32 %s137, 1
        %s220 = scalar_lea.sflag [#allocation6], %s219
        %s221 = sand.u32 %s137, 1
        %s222 = smul.addr %s221, 8
        %s223 = scalar_lea.vmem [#allocation8], %s222
        %p224 = scmp.lt.s32.totalorder %s31, 1
        %s225 = scalar_select %p224, %s31, 1
        %s226 = smul.addr %s225, 8
        %s227 = scalar_lea.vmem %s2, %s226
        %s228 = smul.u32 %s30, 16
        %s229 = smul.u32 %s31, 8
        %s230 = sadd.s32 %s228, %s229
        %s231 = sld [smem:[#allocation4 + %s230]]
        %s232 = scalar_lea.vmem %s4, %s231
        %v233 = vld [vmem:[%s232] sm:$0x1]
        %vm234 = vcmask 253952
        %235 = vst.msk [vmem:[#allocation2] sm:$0x1] %vm234, %v233
        %s236 = sadd.s32 %s230, 1
        %s237 = sld [smem:[#allocation4 + %s236]]
        %s238 = scalar_lea.vmem %s4, %s237
        %v239 = vld [vmem:[%s238] sm:$0x1]
        %240 = vst.msk [vmem:[#allocation2 + $0x1] sm:$0x1] %vm234, %v239
        %s241 = sadd.s32 %s230, 2
        %s242 = sld [smem:[#allocation4 + %s241]]
        %s243 = scalar_lea.vmem %s4, %s242
        %v244 = vld [vmem:[%s243] sm:$0x1]
        %245 = vst.msk [vmem:[#allocation2 + $0x2] sm:$0x1] %vm234, %v244
        %s246 = sadd.s32 %s230, 3
        %s247 = sld [smem:[#allocation4 + %s246]]
        %s248 = scalar_lea.vmem %s4, %s247
        %v249 = vld [vmem:[%s248] sm:$0x1]
        %250 = vst.msk [vmem:[#allocation2 + $0x3] sm:$0x1] %vm234, %v249
        %s251 = sadd.s32 %s230, 4
        %s252 = sld [smem:[#allocation4 + %s251]]
        %s253 = scalar_lea.vmem %s4, %s252
        %v254 = vld [vmem:[%s253] sm:$0x1]
        %255 = vst.msk [vmem:[#allocation2 + $0x4] sm:$0x1] %vm234, %v254
        %s256 = sadd.s32 %s230, 5
        %s257 = sld [smem:[#allocation4 + %s256]]
        %s258 = scalar_lea.vmem %s4, %s257
        %v259 = vld [vmem:[%s258] sm:$0x1]
        %260 = vst.msk [vmem:[#allocation2 + $0x5] sm:$0x1] %vm234, %v259
        %s261 = sadd.s32 %s230, 6
        %s262 = sld [smem:[#allocation4 + %s261]]
        %s263 = scalar_lea.vmem %s4, %s262
        %v264 = vld [vmem:[%s263] sm:$0x1]
        %265 = vst.msk [vmem:[#allocation2 + $0x6] sm:$0x1] %vm234, %v264
        %s266 = sadd.s32 %s230, 7
        %s267 = sld [smem:[#allocation4 + %s266]]
        %s268 = scalar_lea.vmem %s4, %s267
        %v269 = vld [vmem:[%s268] sm:$0x1]
        %270 = vst.msk [vmem:[#allocation2 + $0x7] sm:$0x1] %vm234, %v269
        %s271 = sld [smem:[#allocation5 + %s30]]
        %v272 = vld [vmem:[%s227] sm:$0xff]
        %v273 = vld [vmem:[%s3] sm:$0x1]
        %v274 = vstv %s271
        %v275 = vmul.f32 %v274, %v273
        %v277 = vlaneseq
        %v278 = vshrl.u32 %v277, 7
        %v279 = vsub.s32 0, %v278
        %v280 = vrot.slane %v275, %v279
        %v282 = vadd.f32 %v272, %v280
        %v283 = vmul.f32 %v282, 0.17677669
        %v284 = vld [vmem:[#allocation2] sm:$0xff]
        %v285 = vadd.f32 %v284, %v283
        %vm286 = vcmask 261120
        %287 = vst.msk [vmem:[%s223] sm:$0xff] %vm286, %v285
        %s288 = sand.u32 %s137, 1
        %s289 = scalar_lea.sflag [#allocation6], %s288
        %s290 = sand.u32 %s137, 1
        %s291 = smul.addr %s290, 8
        %s292 = scalar_lea.vmem [#allocation8], %s291
        // Predicated region
        $region41: #{tpu_custom_call.1} parent=35 // pred_check
          %p293 = pneg %p147
        $region42: #{tpu_custom_call.1} parent=35 // pred_check_branch
          %295 = sbr.rel (%p293) target = $region44
        $region43: #{tpu_custom_call.1} parent=35 // pred_region
          %s297 = ssub.s32 128, 128
          %298 = vsyncadd %s289, %s297
          %s299 = smul.addr %s30, 2
          %s300 = sadd.s32 %s31, %s299
          %s301 = smul.addr %s300, 128
          %s302 = scalar_lea.hbm %s5, %s301
          %s304 = sshll.u32 %s292, 4
          %s305 = int_to_ptr.vmem [resolvable:$true] %s304
          %307 = dma.vmem_to_hbm [thread:$0]  %s305, 128, %s302, %s289
        $region44: #{tpu_custom_call.1} parent=35 // pred_fallthru
          _
      $region36: #{tpu_custom_call.1} parent=5 // pred_fallthru
        _
      %p308 = scmp.le.s32.totalorder 2, %s21
      // Predicated region
      $region45: #{tpu_custom_call.1} parent=5 // pred_check
        %p309 = pneg %p308
      $region46: #{tpu_custom_call.1} parent=5 // pred_check_branch
        %311 = sbr.rel (%p309) target = $region48
      $region47: #{tpu_custom_call.1} parent=5 // pred_region
        %s312 = ssub.s32 %s21, 2
        // Predicated region
        $region49: #{tpu_custom_call.1} parent=47 // pred_check
          %p313 = pneg %p153
        $region50: #{tpu_custom_call.1} parent=47 // pred_check_branch
          %315 = sbr.rel (%p313) target = $region52
        $region51: #{tpu_custom_call.1} parent=47 // pred_region
          %s316 = sand.u32 %s138, 1
          %s317 = scalar_lea.sflag [#allocation6], %s316
          %s318 = sand.u32 %s138, 1
          %s319 = smul.addr %s318, 8
          %s320 = scalar_lea.vmem [#allocation8], %s319
          %321 = dma.done %s317, 128
        $region52: #{tpu_custom_call.1} parent=47 // pred_fallthru
          _
      $region48: #{tpu_custom_call.1} parent=5 // pred_fallthru
        _
    $region6: #{tpu_custom_call.1} parent=1 // loop_footer
      %s25 = sadd.s32 1, %s21
    $region7: #{tpu_custom_call.1} parent=1 // loop_footer_branch
      %20 = sbr.rel target = $region3
    $region8: #{tpu_custom_call.1} parent=1 // loop_exit
      _
    %322 = vsyncpa [#allocation6], 1
    %s323 = scalar_lea.sflag [#allocation6], 1
    %324 = vsyncpa %s323, 1
    %325 = vsyncpa [#allocation7], 1
    %s326 = scalar_lea.sflag [#allocation7], 1
    %327 = vsyncpa %s326, 1

</llo_original>
